<compile_context>
chip_gen: v6e
topology: v6e:2x2x1
jax: 0.10.0
libtpu: 0.0.40
codegen_flags: <defaults>
</compile_context>

<pallas_src>
import functools
import math

import jax
import jax.numpy as jnp
from jax.experimental import pallas as pl
from jax.experimental.pallas import tpu as pltpu


def make_pe_buffer(d_model: int, max_len: int = 5000) -> jnp.ndarray:
    """Deterministic construction of the `pe` buffer, matching the torch __init__."""
    dm = d_model + (d_model % 2)  # torch code bumps odd d_model to even
    position = jnp.arange(max_len, dtype=jnp.float32)[:, None]              # (max_len, 1)
    div_term = jnp.exp(
        jnp.arange(0, dm, 2, dtype=jnp.float32) * (-math.log(10000.0) / dm)
    )                                                                        # (dm/2,)
    pe = jnp.zeros((max_len, 1, dm), dtype=jnp.float32)
    pe = pe.at[:, 0, 0::2].set(jnp.sin(position * div_term))
    pe = pe.at[:, 0, 1::2].set(jnp.cos(position * div_term))
    return pe


def prepare_pe(pe: jnp.ndarray, seq_len: int, d_model: int) -> jnp.ndarray:
    """Slice the pe buffer to an (S, D) float32 table, done ONCE at init time.

    Kept in f32 (like torch, which adds the f32 buffer and lets broadcasting
    promote); the in-kernel add happens in f32 and casts at the end."""
    return pe[:seq_len, 0, :d_model].astype(jnp.float32)


def _pos_enc_kernel(seed_ref, x_ref, pe_ref, o_ref, *, p: float, train: bool,
                    grid_rank: int):
    # x_ref / o_ref: (bb, rows, d) tile; pe_ref: (rows, d) float32 tile.
    y = x_ref[...].astype(jnp.float32) + pe_ref[...][None, :, :]
    if train and p > 0.0:
        # Dropout: drop with prob p, scale survivors by 1/(1-p).
        # Unique PRNG stream per grid cell (flat program id).
        flat = pl.program_id(0)
        for ax in range(1, grid_rank):
            flat = flat * pl.num_programs(ax) + pl.program_id(ax)
        pltpu.prng_seed(seed_ref[0] + flat)
        bits = pltpu.prng_random_bits(y.shape)
        if bits.dtype != jnp.uint32:          # defensive no-op on current jax
            bits = pltpu.bitcast(bits, jnp.uint32)
        thresh = jnp.uint32(min(int(p * (2.0 ** 32)), 2 ** 32 - 1))
        y = jnp.where(bits >= thresh, y * (1.0 / (1.0 - p)), 0.0)
    o_ref[...] = y.astype(o_ref.dtype)


def _vmem_capacity_bytes() -> int:
    """Physical VMEM of the attached chip; conservative (v7x-sized) fallback."""
    try:
        cap = getattr(pltpu.get_tpu_info(), "vmem_capacity_bytes", None)
        if cap:
            return int(cap)
    except Exception:
        pass
    try:
        kind = jax.devices()[0].device_kind.lower()
        if "v5" in kind or "v6" in kind:
            return 128 << 20
    except Exception:
        pass
    return 64 << 20


def _budget(dropout_live: bool):
    """(per-block f32-byte target, vmem_limit_bytes) per chip generation."""
    phys = _vmem_capacity_bytes()
    if phys <= (64 << 20):
        # v7x-class: 64 MiB physical VMEM.  Bigger blocks amortize the
        # ~0.35 us/step overhead against ~3.2 TB/s HBM; shrink when the
        # dropout uint32/mask temporaries are live so we stay well under 48 MiB.
        target = (4 << 20) if dropout_live else (6 << 20)
        limit = 48 << 20
    else:
        # v5e/v6e: 128 MiB physical; 4 MiB blocks already sit at ~85-86% of
        # the measured roofline.  Lift the 16/32 MiB scoped default anyway.
        target = 4 << 20
        limit = 64 << 20
    return target, limit


def positional_encoding(x: jnp.ndarray,
                        pe_sd: jnp.ndarray,
                        *,
                        p: float = 0.1,
                        train: bool = False,
                        seed: int = 0) -> jnp.ndarray:
    """x: [batch, seq_len, d_model].  pe_sd: float32 [seq_len, d_model]."""
    B, S, D = x.shape
    assert pe_sd.shape == (S, D), "pe_sd must be the pre-sliced (S, D) table"

    if train and p >= 1.0:
        # torch nn.Dropout(p=1.0) zeroes every element; avoid 1/(1-p)=inf.
        return jnp.zeros_like(x)

    pe_f32 = pe_sd.astype(jnp.float32)
    itemsize = jnp.dtype(x.dtype).itemsize
    dropout_live = bool(train) and p > 0.0
    target, vmem_limit = _budget(dropout_live)

    # Lane-dense view: keep the output last dim a multiple of 128 so stores are
    # unmasked vst (biggest single measured lever). Reshape is metadata-only.
    if D % 128 != 0 and (S * D) % 128 == 0:
        S2, D2 = (S * D) // 128, 128
        x_in = x.reshape(B, S2, D2)
        pe_in = pe_f32.reshape(S2, D2)
    else:
        S2, D2 = S, D
        x_in, pe_in = x, pe_f32
        # TODO(synk): when D % 128 != 0 and S*D % 128 != 0, stores stay masked;
        # zero-padding would add a full extra HBM copy so we accept the penalty.

    # Tile sizing uses the f32 footprint (the in-kernel add promotes to f32).
    row_f32_bytes = D2 * 4
    seq_f32_bytes = S2 * row_f32_bytes
    pack = 8 * max(1, 4 // max(1, itemsize))   # sublane pack: 8 f32 / 16 bf16 / 32 i8

    if seq_f32_bytes <= target:
        # Short-sequence path: fold batch into the block. pe is one constant
        # full-size block (fetched exactly once for the whole kernel).
        bb = max(1, min(B, target // max(1, seq_f32_bytes)))
        while B % bb:
            bb -= 1
        grid = (B // bb,)
        in_specs = [
            pl.BlockSpec((bb, S2, D2), lambda b, seed_ref: (b, 0, 0)),   # x
            pl.BlockSpec((S2, D2), lambda b, seed_ref: (0, 0)),          # pe (constant)
        ]
        out_spec = pl.BlockSpec((bb, S2, D2), lambda b, seed_ref: (b, 0, 0))
    else:
        # Long-sequence path: seq tiles OUTER, batch inner -> pe tile reused
        # across the batch loop (1 pe fetch per seq tile, not per (s, b) step).
        ts = (target // row_f32_bytes) // pack * pack
        ts = max(pack, ts)
        ts = S2 if ts >= S2 else ts
        grid = (pl.cdiv(S2, ts), B)
        in_specs = [
            pl.BlockSpec((1, ts, D2), lambda s, b, seed_ref: (b, s, 0)),  # x
            pl.BlockSpec((ts, D2), lambda s, b, seed_ref: (s, 0)),        # pe
        ]
        out_spec = pl.BlockSpec((1, ts, D2), lambda s, b, seed_ref: (b, s, 0))

    kernel = functools.partial(_pos_enc_kernel, p=float(p), train=bool(train),
                               grid_rank=len(grid))
    cost = pl.CostEstimate(
        flops=int(B * S * D),
        transcendentals=0,
        bytes_accessed=int(2 * B * S * D * itemsize + S * D * 4),
    )
    out = pl.pallas_call(
        kernel,
        out_shape=jax.ShapeDtypeStruct((B, S2, D2), x.dtype),
        grid_spec=pltpu.PrefetchScalarGridSpec(
            num_scalar_prefetch=1,                 # dropout seed lives in SMEM
            grid=grid,
            in_specs=in_specs,
            out_specs=out_spec,
        ),
        compiler_params=pltpu.CompilerParams(
            dimension_semantics=("parallel",) * len(grid),
            vmem_limit_bytes=int(vmem_limit),
        ),
        cost_estimate=cost,
    )(jnp.array([seed], dtype=jnp.int32), x_in, pe_in)
    return out.reshape(B, S, D)


if __name__ == "__main__":
    # Small shapes consistent with the module's forward: [batch, seq_len, d_model]
    B, S, D = 2, 8, 32
    key = jax.random.PRNGKey(0)
    x = jax.random.normal(key, (B, S, D), dtype=jnp.float32)

    pe = make_pe_buffer(D, max_len=5000)
    pe_sd = prepare_pe(pe, S, D)                   # hoisted: done once, not per call

    # Eval-mode forward (dropout is identity) — deterministic, checkable.
    out = jax.block_until_ready(positional_encoding(x, pe_sd, p=0.1, train=False))
    ref = x + pe_sd[None, :, :].astype(x.dtype)
    assert out.shape == (B, S, D)
    assert jnp.allclose(out, ref, atol=1e-6, rtol=1e-6)

    # Training-mode dropout uses the TPU hardware PRNG (pltpu.prng_*), which has
    # no CPU/interpret lowering — only exercise it when the backend is a real TPU.
    # TODO(synk): torch's dropout RNG stream cannot be reproduced bit-exactly;
    # dropout here uses the on-chip PRNG with a deterministic per-tile seed.
    if jax.default_backend() == "tpu":
        out_train = jax.block_until_ready(
            positional_encoding(x, pe_sd, p=0.1, train=True, seed=1234))
        assert out_train.shape == (B, S, D)
        assert bool(jnp.all(jnp.isfinite(out_train)))

    print("KERNEL_OK")
</pallas_src>

<mosaic_0001>
module attributes {stable_mosaic.version = 11 : i64} {
  func.func @_pos_enc_kernel(%arg0: i32, %arg1: memref<1xi32, #tpu.memory_space<smem>>, %arg2: memref<2x2x128xf32, #tpu.memory_space<vmem>>, %arg3: memref<2x128xf32, #tpu.memory_space<vmem>>, %arg4: memref<2x2x128xf32, #tpu.memory_space<vmem>>) attributes {dimension_semantics = [#tpu.dimension_semantics<parallel>], iteration_bounds = array<i64: 1>, scalar_prefetch = 1 : i64, scratch_operands = 0 : i64, tpu.core_type = #tpu.core_type<tc>, window_params = [{transform_indices = @transform_0, window_bounds = array<i64: 2, 2, 128>}, {pipeline_mode = #tpu.pipeline_mode<synchronous>, transform_indices = @transform_1, window_bounds = array<i64: 2, 128>}, {transform_indices = @transform_2, window_bounds = array<i64: 2, 2, 128>}]} {
    %c0 = arith.constant 0 : index
    %c0_0 = arith.constant 0 : index
    %c0_1 = arith.constant 0 : index
    %0 = vector.load %arg2[%c0, %c0_0, %c0_1] : memref<2x2x128xf32, #tpu.memory_space<vmem>>, vector<2x2x128xf32>
    %c0_2 = arith.constant 0 : index
    %c0_3 = arith.constant 0 : index
    %1 = vector.load %arg3[%c0_2, %c0_3] : memref<2x128xf32, #tpu.memory_space<vmem>>, vector<2x128xf32>
    %2 = vector.shape_cast %1 : vector<2x128xf32> to vector<1x2x128xf32>
    %3 = vector.broadcast %2 : vector<1x2x128xf32> to vector<2x2x128xf32>
    %4 = arith.addf %0, %3 : vector<2x2x128xf32>
    %c0_4 = arith.constant 0 : index
    %c0_5 = arith.constant 0 : index
    %c0_6 = arith.constant 0 : index
    %5 = vector.load %arg4[%c0_4, %c0_5, %c0_6] : memref<2x2x128xf32, #tpu.memory_space<vmem>>, vector<2x2x128xf32>
    tpu.vector_store %arg4[%c0_4, %c0_5, %c0_6], %4 {strides = array<i32>} : memref<2x2x128xf32, #tpu.memory_space<vmem>>, vector<2x2x128xf32>,
    return
  }
  func.func @transform_0(%arg0: i32, %arg1: memref<1xi32, #tpu.memory_space<smem>>) -> (i32, i32, i32) {
    %c0_i32 = arith.constant 0 : i32
    %c0_i32_0 = arith.constant 0 : i32
    %c0_i32_1 = arith.constant 0 : i32
    return %arg0, %c0_i32, %c0_i32_0 : i32, i32, i32
  }
  func.func @transform_1(%arg0: i32, %arg1: memref<1xi32, #tpu.memory_space<smem>>) -> (i32, i32) {
    %c0_i32 = arith.constant 0 : i32
    %c0_i32_0 = arith.constant 0 : i32
    %c0_i32_1 = arith.constant 0 : i32
    return %c0_i32, %c0_i32_0 : i32, i32
  }
  func.func @transform_2(%arg0: i32, %arg1: memref<1xi32, #tpu.memory_space<smem>>) -> (i32, i32, i32) {
    %c0_i32 = arith.constant 0 : i32
    %c0_i32_0 = arith.constant 0 : i32
    %c0_i32_1 = arith.constant 0 : i32
    return %arg0, %c0_i32, %c0_i32_0 : i32, i32, i32
  }
}

</mosaic_0001>

<llo_original>
// kernel: tpu_custom_call.1
$region0: #{tpu_custom_call.1}
  #allocation0 [shape = 'u32[]', space=smem, size = 0x4, offset = 0x4, fixed_abs, tag = 'smem constant byte address 0x4 - core index']
  #allocation1 [shape = 'u32[144,128]{1,0:T(1,128)}', space=vmem, size = 0x12000, scoped, tag = 'internal scratch']
  #allocation2 [shape = 's32[1]{0}', space=sflag, size = 0x4, scoped, tag = 'scoped memory for tpu_custom_call.1']
  #allocation3 [shape = 's32[1]{0:T(128)S(6)}', space=smem, size = 0x200, scoped, tag = 'prefetched SMEM operand 0']
  %s0 = inlined_call_operand.<no memory space> [shape: s32[1], index: 0, kind: input, shape index: {}]
  %s1 = inlined_call_operand.hbm [shape: f32[2,2,128], index: 1, kind: input, shape index: {}]
  %s2 = inlined_call_operand.vmem [shape: f32[2,128], index: 2, kind: input, shape index: {}]
  %s3 = inlined_call_operand.hbm [shape: f32[2,2,128], index: 3, kind: output, shape index: {}]
  %s4 = sld [smem:[#allocation0]]
  $region22: #{tpu_custom_call.1} parent=0
    _
  %s6 = ssub.s32 1, %s4
  %s7 = scalar_select 0, %s6, %s4
  %8 = sst [smem:[#allocation3]] %s0
  $region1: #{tpu_custom_call.1} parent=0
    #allocation4 [shape = 'u8[2048]{0}', space=vmem, size = 0x800, scoped, tag = 'input window, operand 1, single buffered']
    #allocation5 [shape = 's32[1]{0}', space=sflag, size = 0x4, scoped, tag = 'scoped memory for tpu_custom_call.1']
    #allocation6 [shape = 's32[1]{0}', space=sflag, size = 0x4, scoped, tag = 'scoped memory for tpu_custom_call.1']
    #allocation7 [shape = 'u8[2048]{0}', space=vmem, size = 0x800, scoped, tag = 'output window, operand 0, single buffered']
    %9 = vsyncpa [#allocation5], 0
    %10 = vsyncpa [#allocation6], 0
    // Predicated region
    $region2: #{tpu_custom_call.1} parent=1 // pred_check
      _
    $region3: #{tpu_custom_call.1} parent=1 // pred_check_branch
      %12 = sbr.rel (0) target = $region5
    $region4: #{tpu_custom_call.1} parent=1 // pred_region
      %s14 = ssub.s32 64, 64
      %15 = vsyncadd [#allocation5], %s14
      %s16 = sshll.u32 [#allocation4], 4
      %s17 = int_to_ptr.vmem [resolvable:$true] %s16
      %22 = dma.hbm_to_vmem [thread:$0]  %s1, 64, %s17, [#allocation5], 32, 32, 2
    $region5: #{tpu_custom_call.1} parent=1 // pred_fallthru
      _
    // Predicated region
    $region6: #{tpu_custom_call.1} parent=1 // pred_check
      _
    $region7: #{tpu_custom_call.1} parent=1 // pred_check_branch
      %24 = sbr.rel (0) target = $region9
    $region8: #{tpu_custom_call.1} parent=1 // pred_region
      _
    $region9: #{tpu_custom_call.1} parent=1 // pred_fallthru
      _
    // Predicated region
    $region10: #{tpu_custom_call.1} parent=1 // pred_check
      _
    $region11: #{tpu_custom_call.1} parent=1 // pred_check_branch
      %26 = sbr.rel (0) target = $region13
    $region12: #{tpu_custom_call.1} parent=1 // pred_region
      %27 = dma.done [#allocation5], 64
    $region13: #{tpu_custom_call.1} parent=1 // pred_fallthru
      _
    %v28 = vld [vmem:[#allocation4] sm:$0x3]
    %v29 = vld [vmem:[#allocation4 + $0x2] sm:$0x3]
    %v30 = vld [vmem:[%s2] sm:$0x3]
    %v31 = vadd.f32 %v28, %v30
    %v32 = vadd.f32 %v29, %v30
    %33 = vst [vmem:[#allocation7] sm:$0x3] %v31
    %34 = vst [vmem:[#allocation7 + $0x2] sm:$0x3] %v32
    // Predicated region
    $region14: #{tpu_custom_call.1} parent=1 // pred_check
      _
    $region15: #{tpu_custom_call.1} parent=1 // pred_check_branch
      %36 = sbr.rel (0) target = $region17
    $region16: #{tpu_custom_call.1} parent=1 // pred_region
      %s38 = ssub.s32 64, 64
      %39 = vsyncadd [#allocation6], %s38
      %s40 = sshll.u32 [#allocation7], 4
      %s41 = int_to_ptr.vmem [resolvable:$true] %s40
      %46 = dma.vmem_to_hbm [thread:$0]  %s41, 64, %s3, [#allocation6], 32, 32, 2
    $region17: #{tpu_custom_call.1} parent=1 // pred_fallthru
      _
    // Predicated region
    $region18: #{tpu_custom_call.1} parent=1 // pred_check
      _
    $region19: #{tpu_custom_call.1} parent=1 // pred_check_branch
      %48 = sbr.rel (0) target = $region21
    $region20: #{tpu_custom_call.1} parent=1 // pred_region
      %49 = dma.done [#allocation6], 64
    $region21: #{tpu_custom_call.1} parent=1 // pred_fallthru
      _
    %50 = vsyncpa [#allocation5], 1
    %51 = vsyncpa [#allocation6], 1

</llo_original>
